<compile_context>
chip_gen: v6e
topology: v6e:2x2x1
jax: 0.10.0
libtpu: 0.0.40
codegen_flags: <defaults>
</compile_context>

<pallas_src>
import jax
import jax.numpy as jnp
from jax import lax
from jax.experimental import pallas as pl
from jax.experimental.pallas import tpu as pltpu

_NEG_BIG = -1e30  # bias for padded vocab columns -> exp underflows to exactly 0


def _make_generator_kernel(grid_j: int, tn: int):
    """Build the kernel for a fixed number of vocab tiles (grid_j) of width tn."""

    def kernel(x_ref, w_ref, b_ref, o_ref, acc_ref, m_ref, l_ref):
        # x_ref:   (tm, d_model)       row tile (resident across the vocab axis)
        # w_ref:   (tn, d_model)       weight slab, nn.Linear layout (no transpose)
        # b_ref:   (1, tn)             bias slab (f32)
        # o_ref:   (tm, v_pad)         output block, resident across the vocab axis
        # acc_ref: (grid_j, tm, tn)    f32 logits stash
        # m_ref, l_ref: (tm, 1)        online-softmax running max / running sum
        j = pl.program_id(1)

        @pl.when(j == 0)
        def _init():
            m_ref[...] = jnp.full_like(m_ref, -jnp.inf)
            l_ref[...] = jnp.zeros_like(l_ref)

        # (tm, tn) logits on the MXU: contract over d_model, accumulate in f32.
        logits = lax.dot_general(
            x_ref[...], w_ref[...],
            dimension_numbers=(((1,), (1,)), ((), ())),
            preferred_element_type=jnp.float32,
        ) + b_ref[...]

        # Online softmax statistics over the vocab axis.
        m_prev = m_ref[...]
        m_new = jnp.maximum(m_prev, jnp.max(logits, axis=-1, keepdims=True))
        l_ref[...] = (jnp.exp(m_prev - m_new) * l_ref[...]
                      + jnp.sum(jnp.exp(logits - m_new), axis=-1, keepdims=True))
        m_ref[...] = m_new

        # Stash raw f32 logits; normalization happens once, at the last vocab step.
        acc_ref[j] = logits

        @pl.when(j == grid_j - 1)
        def _finalize():
            l = l_ref[...]
            # EUP reciprocal (own VLIW slot) + one Newton step to recover f32 accuracy
            # on a tiny (tm, 1) vector — keeps the divide off the VALU critical path.
            inv_l = pl.reciprocal(l, approx=True)
            inv_l = inv_l * (2.0 - l * inv_l)
            m = m_ref[...]
            for jj in range(grid_j):  # static unroll -> lane-dense 128-aligned stores
                o_ref[:, jj * tn:(jj + 1) * tn] = (
                    jnp.exp(acc_ref[jj] - m) * inv_l
                ).astype(o_ref.dtype)

    return kernel


def _round_up(x: int, m: int) -> int:
    return (x + m - 1) // m * m


def generator_forward(x, weight, bias, *, tm=256, tn=1024, compute_dtype=None):
    """Pallas equivalent of Generator.forward: softmax(x @ weight.T + bias, axis=-1).

    x:      (..., d_model)
    weight: (vocab, d_model)   -- torch nn.Linear convention (never transposed in HBM)
    bias:   (vocab,)
    tm:     row tile (v6e/v7x: 256, v5e: 128)
    tn:     max vocab tile width (rounded down to a multiple of 128)
    compute_dtype: optionally cast x/weight (e.g. jnp.bfloat16) for the native MXU
                   path; accumulation and the softmax stay in f32.
    """
    d_model = x.shape[-1]
    vocab = weight.shape[0]
    lead_shape = x.shape[:-1]
    out_dtype = x.dtype

    x2d = x.reshape(-1, d_model)
    n_rows = x2d.shape[0]

    if compute_dtype is not None:
        x2d = x2d.astype(compute_dtype)
        weight = weight.astype(compute_dtype)
    bias = bias.astype(jnp.float32)

    # --- vocab tiling: lane-dense (multiple of 128) padded width --------------------
    v_pad = _round_up(vocab, 128)
    tn = max(128, (int(tn) // 128) * 128)
    # Largest multiple-of-128 tile <= tn that divides v_pad (no second padding pass).
    tn_eff = 128
    for cand in range(min(tn, v_pad), 127, -128):
        if v_pad % cand == 0:
            tn_eff = cand
            break
    grid_j = v_pad // tn_eff

    if v_pad != vocab:
        pad_v = v_pad - vocab
        weight = jnp.concatenate(
            [weight, jnp.zeros((pad_v, d_model), weight.dtype)], axis=0)
        bias = jnp.concatenate(
            [bias, jnp.full((pad_v,), _NEG_BIG, jnp.float32)], axis=0)
    b2d = bias.reshape(1, v_pad)

    # --- row tiling: no padding copy; partial last block is masked by Pallas --------
    tm = max(8, (int(tm) // 8) * 8)
    tm_eff = min(tm, _round_up(n_rows, 8))
    grid_i = pl.cdiv(n_rows, tm_eff)

    # --- compiler params: raise the scoped-VMEM limit only if the tiles need it -----
    x_bytes = jnp.dtype(x2d.dtype).itemsize
    w_bytes = jnp.dtype(weight.dtype).itemsize
    o_bytes = jnp.dtype(out_dtype).itemsize
    vmem_est = (2 * tm_eff * d_model * x_bytes          # x tile   (double buffered)
                + 2 * tn_eff * d_model * w_bytes        # weight slab
                + 2 * tn_eff * 4                        # bias slab
                + 2 * tm_eff * v_pad * o_bytes          # output block
                + tm_eff * v_pad * 4                    # f32 logits stash
                + (1 << 20))
    cp = dict(dimension_semantics=("parallel", "arbitrary"))
    if vmem_est > 30 * 1024 * 1024:
        cp["vmem_limit_bytes"] = min(int(vmem_est * 5 // 4), 120 * 1024 * 1024)

    kernel = _make_generator_kernel(grid_j, tn_eff)

    out = pl.pallas_call(
        kernel,
        out_shape=jax.ShapeDtypeStruct((n_rows, v_pad), out_dtype),
        grid_spec=pltpu.PrefetchScalarGridSpec(
            num_scalar_prefetch=0,
            grid=(grid_i, grid_j),
            in_specs=[
                pl.BlockSpec((tm_eff, d_model), lambda i, j: (i, 0)),
                pl.BlockSpec((tn_eff, d_model), lambda i, j: (j, 0)),
                pl.BlockSpec((1, tn_eff), lambda i, j: (0, j)),
            ],
            out_specs=pl.BlockSpec((tm_eff, v_pad), lambda i, j: (i, 0)),
            scratch_shapes=[
                pltpu.VMEM((grid_j, tm_eff, tn_eff), jnp.float32),  # logits stash
                pltpu.VMEM((tm_eff, 1), jnp.float32),               # running max
                pltpu.VMEM((tm_eff, 1), jnp.float32),               # running sum
            ],
        ),
        compiler_params=pltpu.CompilerParams(**cp),
    )(x2d, weight, b2d)

    if v_pad != vocab:
        out = out[:, :vocab]
    return out.reshape(*lead_shape, vocab)


if __name__ == "__main__":
    key = jax.random.PRNGKey(0)
    kx, kw, kb, k2x, k2w, k2b = jax.random.split(key, 6)

    # Small shapes consistent with the module: batch=2, seq=8, d_model=32, vocab=64.
    batch, seq, d_model, vocab = 2, 8, 32, 64
    x = jax.random.normal(kx, (batch, seq, d_model), dtype=jnp.float32)
    bound = 1.0 / (d_model ** 0.5)
    weight = jax.random.uniform(kw, (vocab, d_model), jnp.float32, -bound, bound)
    bias = jax.random.uniform(kb, (vocab,), jnp.float32, -bound, bound)

    out = jax.block_until_ready(generator_forward(x, weight, bias))
    ref = jax.nn.softmax(x @ weight.T + bias, axis=-1)
    assert out.shape == (batch, seq, vocab)
    assert jnp.allclose(out, ref, atol=2e-3, rtol=2e-3)
    assert jnp.allclose(jnp.sum(out, axis=-1), 1.0, atol=2e-3)

    # Exercise the general path: multiple row tiles (partial last block), multiple
    # vocab tiles (online softmax), vocab padded to the 128-lane boundary.
    b2, s2, d2, v2 = 2, 100, 64, 300
    x2 = jax.random.normal(k2x, (b2, s2, d2), dtype=jnp.float32)
    bnd2 = 1.0 / (d2 ** 0.5)
    w2 = jax.random.uniform(k2w, (v2, d2), jnp.float32, -bnd2, bnd2)
    bias2 = jax.random.uniform(k2b, (v2,), jnp.float32, -bnd2, bnd2)

    out2 = jax.block_until_ready(generator_forward(x2, w2, bias2, tm=64, tn=128))
    ref2 = jax.nn.softmax(x2 @ w2.T + bias2, axis=-1)
    assert out2.shape == (b2, s2, v2)
    assert jnp.allclose(out2, ref2, atol=2e-3, rtol=2e-3)
    assert jnp.allclose(jnp.sum(out2, axis=-1), 1.0, atol=2e-3)

    # bf16 weights/activations (halved weight VMEM + DMA, native MXU path), f32 accum.
    out_bf = jax.block_until_ready(
        generator_forward(x2, w2, bias2, tm=64, tn=128, compute_dtype=jnp.bfloat16))
    ref_bf = jax.nn.softmax(
        jnp.dot(x2.astype(jnp.bfloat16), w2.astype(jnp.bfloat16).T,
                preferred_element_type=jnp.float32) + bias2, axis=-1)
    assert out_bf.shape == (b2, s2, v2)
    assert jnp.allclose(out_bf, ref_bf.astype(out_bf.dtype), atol=2e-2)

    print("KERNEL_OK")
</pallas_src>

<mosaic_0001>
module attributes {stable_mosaic.version = 11 : i64} {
  func.func @kernel(%arg0: i32, %arg1: i32, %arg2: memref<16x32xf32, #tpu.memory_space<vmem>>, %arg3: memref<128x32xf32, #tpu.memory_space<vmem>>, %arg4: memref<1x128xf32, #tpu.memory_space<vmem>>, %arg5: memref<16x128xf32, #tpu.memory_space<vmem>>, %arg6: memref<1x16x128xf32, #tpu.memory_space<vmem>>, %arg7: memref<16x1xf32, #tpu.memory_space<vmem>>, %arg8: memref<16x1xf32, #tpu.memory_space<vmem>>) attributes {dimension_semantics = [#tpu.dimension_semantics<parallel>, #tpu.dimension_semantics<arbitrary>], iteration_bounds = array<i64: 1, 1>, scalar_prefetch = 0 : i64, scratch_operands = 3 : i64, tpu.core_type = #tpu.core_type<tc>, window_params = [{transform_indices = @transform_0, window_bounds = array<i64: 16, 32>}, {transform_indices = @transform_1, window_bounds = array<i64: 128, 32>}, {transform_indices = @transform_2, window_bounds = array<i64: 1, 128>}, {transform_indices = @transform_3, window_bounds = array<i64: 16, 128>}]} {
    %c0_i32 = arith.constant 0 : i32
    %0 = arith.cmpi eq, %arg1, %c0_i32 : i32
    %1 = arith.extui %0 : i1 to i32
    %c0_i32_0 = arith.constant 0 : i32
    %2 = arith.cmpi ne, %1, %c0_i32_0 : i32
    scf.if %2 {
      %cst_20 = arith.constant 0xFF800000 : f32
      %32 = vector.broadcast %cst_20 : f32 to vector<16x1xf32>
      %c0_21 = arith.constant 0 : index
      %c0_22 = arith.constant 0 : index
      %33 = vector.load %arg7[%c0_21, %c0_22] : memref<16x1xf32, #tpu.memory_space<vmem>>, vector<16x1xf32>
      tpu.vector_store %arg7[%c0_21, %c0_22], %32 {strides = array<i32>} : memref<16x1xf32, #tpu.memory_space<vmem>>, vector<16x1xf32>,
      %cst_23 = arith.constant 0.000000e+00 : f32
      %34 = vector.broadcast %cst_23 : f32 to vector<16x1xf32>
      %c0_24 = arith.constant 0 : index
      %c0_25 = arith.constant 0 : index
      %35 = vector.load %arg8[%c0_24, %c0_25] : memref<16x1xf32, #tpu.memory_space<vmem>>, vector<16x1xf32>
      tpu.vector_store %arg8[%c0_24, %c0_25], %34 {strides = array<i32>} : memref<16x1xf32, #tpu.memory_space<vmem>>, vector<16x1xf32>,
    } else {
    }
    %c0 = arith.constant 0 : index
    %c0_1 = arith.constant 0 : index
    %3 = vector.load %arg2[%c0, %c0_1] : memref<16x32xf32, #tpu.memory_space<vmem>>, vector<16x32xf32>
    %c0_2 = arith.constant 0 : index
    %c0_3 = arith.constant 0 : index
    %4 = vector.load %arg3[%c0_2, %c0_3] : memref<128x32xf32, #tpu.memory_space<vmem>>, vector<128x32xf32>
    %cst = arith.constant dense<0.000000e+00> : vector<16x128xf32>
    %5 = tpu.matmul %3, %4, %cst {dimension_numbers = #tpu.dot_dimension_numbers<[1], [1], [0], [0], [0, 0, 1, 0], [], []>} : vector<16x32xf32>, vector<128x32xf32>, vector<16x128xf32> -> vector<16x128xf32>
    %c0_4 = arith.constant 0 : index
    %c0_5 = arith.constant 0 : index
    %6 = vector.load %arg4[%c0_4, %c0_5] : memref<1x128xf32, #tpu.memory_space<vmem>>, vector<1x128xf32>
    %7 = vector.broadcast %6 : vector<1x128xf32> to vector<16x128xf32>
    %8 = arith.addf %5, %7 : vector<16x128xf32>
    %c0_6 = arith.constant 0 : index
    %c0_7 = arith.constant 0 : index
    %9 = vector.load %arg7[%c0_6, %c0_7] : memref<16x1xf32, #tpu.memory_space<vmem>>, vector<16x1xf32>
    %cst_8 = arith.constant dense<0xFF800000> : vector<16xf32>
    %10 = vector.multi_reduction <maximumf>, %8, %cst_8 [1] : vector<16x128xf32> to vector<16xf32>
    %11 = vector.shape_cast %10 : vector<16xf32> to vector<16x1xf32>
    %12 = arith.maximumf %9, %11 : vector<16x1xf32>
    %13 = arith.subf %9, %12 : vector<16x1xf32>
    %14 = math.exp %13 : vector<16x1xf32>
    %c0_9 = arith.constant 0 : index
    %c0_10 = arith.constant 0 : index
    %15 = vector.load %arg8[%c0_9, %c0_10] : memref<16x1xf32, #tpu.memory_space<vmem>>, vector<16x1xf32>
    %16 = arith.mulf %14, %15 : vector<16x1xf32>
    %17 = vector.broadcast %12 : vector<16x1xf32> to vector<16x128xf32>
    %18 = arith.subf %8, %17 : vector<16x128xf32>
    %19 = math.exp %18 : vector<16x128xf32>
    %cst_11 = arith.constant dense<0.000000e+00> : vector<16xf32>
    %20 = vector.multi_reduction <add>, %19, %cst_11 [1] : vector<16x128xf32> to vector<16xf32>
    %21 = vector.shape_cast %20 : vector<16xf32> to vector<16x1xf32>
    %22 = arith.addf %16, %21 : vector<16x1xf32>
    %c0_12 = arith.constant 0 : index
    %c0_13 = arith.constant 0 : index
    %23 = vector.load %arg8[%c0_12, %c0_13] : memref<16x1xf32, #tpu.memory_space<vmem>>, vector<16x1xf32>
    tpu.vector_store %arg8[%c0_12, %c0_13], %22 {strides = array<i32>} : memref<16x1xf32, #tpu.memory_space<vmem>>, vector<16x1xf32>,
    %c0_14 = arith.constant 0 : index
    %c0_15 = arith.constant 0 : index
    %24 = vector.load %arg7[%c0_14, %c0_15] : memref<16x1xf32, #tpu.memory_space<vmem>>, vector<16x1xf32>
    tpu.vector_store %arg7[%c0_14, %c0_15], %12 {strides = array<i32>} : memref<16x1xf32, #tpu.memory_space<vmem>>, vector<16x1xf32>,
    %25 = arith.index_cast %arg1 : i32 to index
    %c0_16 = arith.constant 0 : index
    %c0_17 = arith.constant 0 : index
    %26 = vector.load %arg6[%25, %c0_16, %c0_17] : memref<1x16x128xf32, #tpu.memory_space<vmem>>, vector<1x16x128xf32>
    %27 = vector.shape_cast %26 : vector<1x16x128xf32> to vector<16x128xf32>
    %28 = vector.shape_cast %8 : vector<16x128xf32> to vector<1x16x128xf32>
    tpu.vector_store %arg6[%25, %c0_16, %c0_17], %28 {strides = array<i32>} : memref<1x16x128xf32, #tpu.memory_space<vmem>>, vector<1x16x128xf32>,
    %c0_i32_18 = arith.constant 0 : i32
    %29 = arith.cmpi eq, %arg1, %c0_i32_18 : i32
    %30 = arith.extui %29 : i1 to i32
    %c0_i32_19 = arith.constant 0 : i32
    %31 = arith.cmpi ne, %30, %c0_i32_19 : i32
    scf.if %31 {
      %c0_20 = arith.constant 0 : index
      %c0_21 = arith.constant 0 : index
      %32 = vector.load %arg8[%c0_20, %c0_21] : memref<16x1xf32, #tpu.memory_space<vmem>>, vector<16x1xf32>
      %33 = tpu.reciprocal %32 {approx = true} : vector<16x1xf32> -> vector<16x1xf32>
      %34 = arith.mulf %32, %33 : vector<16x1xf32>
      %cst_22 = arith.constant 2.000000e+00 : f32
      %35 = vector.broadcast %cst_22 : f32 to vector<16x1xf32>
      %36 = arith.subf %35, %34 : vector<16x1xf32>
      %37 = arith.mulf %33, %36 : vector<16x1xf32>
      %c0_23 = arith.constant 0 : index
      %c0_24 = arith.constant 0 : index
      %38 = vector.load %arg7[%c0_23, %c0_24] : memref<16x1xf32, #tpu.memory_space<vmem>>, vector<16x1xf32>
      %c0_25 = arith.constant 0 : index
      %c0_26 = arith.constant 0 : index
      %c0_27 = arith.constant 0 : index
      %39 = vector.load %arg6[%c0_25, %c0_26, %c0_27] : memref<1x16x128xf32, #tpu.memory_space<vmem>>, vector<1x16x128xf32>
      %40 = vector.shape_cast %39 : vector<1x16x128xf32> to vector<16x128xf32>
      %41 = vector.broadcast %38 : vector<16x1xf32> to vector<16x128xf32>
      %42 = arith.subf %40, %41 : vector<16x128xf32>
      %43 = math.exp %42 : vector<16x128xf32>
      %44 = vector.broadcast %37 : vector<16x1xf32> to vector<16x128xf32>
      %45 = arith.mulf %43, %44 : vector<16x128xf32>
      %c0_28 = arith.constant 0 : index
      %c0_29 = arith.constant 0 : index
      %46 = vector.load %arg5[%c0_28, %c0_29] : memref<16x128xf32, #tpu.memory_space<vmem>>, vector<16x128xf32>
      tpu.vector_store %arg5[%c0_28, %c0_29], %45 {strides = array<i32>} : memref<16x128xf32, #tpu.memory_space<vmem>>, vector<16x128xf32>,
    } else {
    }
    return
  }
  func.func @transform_0(%arg0: i32, %arg1: i32) -> (i32, i32) {
    %c0_i32 = arith.constant 0 : i32
    %c0_i32_0 = arith.constant 0 : i32
    return %arg0, %c0_i32 : i32, i32
  }
  func.func @transform_1(%arg0: i32, %arg1: i32) -> (i32, i32) {
    %c0_i32 = arith.constant 0 : i32
    %c0_i32_0 = arith.constant 0 : i32
    return %arg1, %c0_i32 : i32, i32
  }
  func.func @transform_2(%arg0: i32, %arg1: i32) -> (i32, i32) {
    %c0_i32 = arith.constant 0 : i32
    %c0_i32_0 = arith.constant 0 : i32
    return %c0_i32, %arg1 : i32, i32
  }
  func.func @transform_3(%arg0: i32, %arg1: i32) -> (i32, i32) {
    %c0_i32 = arith.constant 0 : i32
    %c0_i32_0 = arith.constant 0 : i32
    return %arg0, %c0_i32 : i32, i32
  }
}

</mosaic_0001>

<llo_original>
// kernel: tpu_custom_call.1
$region0: #{tpu_custom_call.1}
  #allocation0 [shape = 'u32[]', space=smem, size = 0x4, offset = 0x4, fixed_abs, tag = 'smem constant byte address 0x4 - core index']
  #allocation1 [shape = 'u32[144,128]{1,0:T(1,128)}', space=vmem, size = 0x12000, scoped, tag = 'internal scratch']
  #allocation2 [shape = 'f32[1,16,128]{2,1,0:T(8,128)}', space=vmem, size = 0x2000, scoped, tag = 'scratch operand']
  #allocation3 [shape = 'f32[16,1]{1,0:T(8,128)}', space=vmem, size = 0x2000, scoped, tag = 'scratch operand']
  #allocation4 [shape = 'f32[16,1]{1,0:T(8,128)}', space=vmem, size = 0x2000, scoped, tag = 'scratch operand']
  %s0 = inlined_call_operand.vmem [shape: f32[16,32], index: 0, kind: input, shape index: {}]
  %s1 = inlined_call_operand.vmem [shape: f32[128,32], index: 1, kind: input, shape index: {}]
  %s2 = inlined_call_operand.vmem [shape: f32[1,128], index: 2, kind: input, shape index: {}]
  %s3 = inlined_call_operand.hbm [shape: f32[16,128], index: 3, kind: output, shape index: {}]
  %s4 = sld [smem:[#allocation0]]
  $region30: #{tpu_custom_call.1} parent=0
    _
  %s6 = ssub.s32 1, %s4
  %s7 = scalar_select 0, %s6, %s4
  $region1: #{tpu_custom_call.1} parent=0
    #allocation5 [shape = 'u8[8192]{0}', space=vmem, size = 0x2000, scoped, tag = 'output window, operand 0, single buffered']
    #allocation6 [shape = 's32[1]{0}', space=sflag, size = 0x4, scoped, tag = 'scoped memory for tpu_custom_call.1']
    %8 = vsyncpa [#allocation6], 0
    // Predicated region
    $region2: #{tpu_custom_call.1} parent=1 // pred_check
      _
    $region3: #{tpu_custom_call.1} parent=1 // pred_check_branch
      %10 = sbr.rel (0) target = $region5
    $region4: #{tpu_custom_call.1} parent=1 // pred_region
      _
    $region5: #{tpu_custom_call.1} parent=1 // pred_fallthru
      _
    // Predicated region
    $region6: #{tpu_custom_call.1} parent=1 // pred_check
      _
    $region7: #{tpu_custom_call.1} parent=1 // pred_check_branch
      %12 = sbr.rel (0) target = $region9
    $region8: #{tpu_custom_call.1} parent=1 // pred_region
      _
    $region9: #{tpu_custom_call.1} parent=1 // pred_fallthru
      _
    // Predicated region
    $region10: #{tpu_custom_call.1} parent=1 // pred_check
      _
    $region11: #{tpu_custom_call.1} parent=1 // pred_check_branch
      %14 = sbr.rel (0) target = $region13
    $region12: #{tpu_custom_call.1} parent=1 // pred_region
      _
    $region13: #{tpu_custom_call.1} parent=1 // pred_fallthru
      _
    %p15 = scmp.eq.s32.totalorder 0, 0
    // Predicated region
    $region14: #{tpu_custom_call.1} parent=1 // pred_check
      %p16 = pneg %p15
    $region15: #{tpu_custom_call.1} parent=1 // pred_check_branch
      %18 = sbr.rel (%p16) target = $region17
    $region16: #{tpu_custom_call.1} parent=1 // pred_region
      %vm19 = vcmask 7168
      %20 = vst.msk [vmem:[#allocation3] sm:$0xff] %vm19, -inf
      %21 = vst.msk [vmem:[#allocation3 + $0x8] sm:$0xff] %vm19, -inf
      %22 = vst.msk [vmem:[#allocation4] sm:$0xff] %vm19, 0.0
      %23 = vst.msk [vmem:[#allocation4 + $0x8] sm:$0xff] %vm19, 0.0
    $region17: #{tpu_custom_call.1} parent=1 // pred_fallthru
      _
    %v24 = vld [vmem:[%s0] sm:$0xff]
    %v25 = vld [vmem:[%s0 + $0x8] sm:$0xff]
    %v26 = vld [vmem:[%s1] sm:$0xff]
    %v27 = vld [vmem:[%s1 + $0x8] sm:$0xff]
    %v28 = vld [vmem:[%s1 + $0x10] sm:$0xff]
    %v29 = vld [vmem:[%s1 + $0x18] sm:$0xff]
    %v30 = vld [vmem:[%s1 + $0x20] sm:$0xff]
    %v31 = vld [vmem:[%s1 + $0x28] sm:$0xff]
    %v32 = vld [vmem:[%s1 + $0x30] sm:$0xff]
    %v33 = vld [vmem:[%s1 + $0x38] sm:$0xff]
    %v34 = vld [vmem:[%s1 + $0x40] sm:$0xff]
    %v35 = vld [vmem:[%s1 + $0x48] sm:$0xff]
    %v36 = vld [vmem:[%s1 + $0x50] sm:$0xff]
    %v37 = vld [vmem:[%s1 + $0x58] sm:$0xff]
    %v38 = vld [vmem:[%s1 + $0x60] sm:$0xff]
    %v39 = vld [vmem:[%s1 + $0x68] sm:$0xff]
    %v40 = vld [vmem:[%s1 + $0x70] sm:$0xff]
    %v41 = vld [vmem:[%s1 + $0x78] sm:$0xff]
    %v42 = vld [vmem:[%s2] sm:$0x1]
    %v44 = vlaneseq
    %v45 = vshrl.u32 %v44, 7
    %v46 = vsub.s32 0, %v45
    %v47 = vrot.slane %v42, %v46
    %vm49 = vcmask 261120
    %v51 = vsel %vm49, %v24, 0
    %v54 = vsel %vm49, %v25, 0
    %v57 = vsel %vm49, %v26, 0
    %v60 = vsel %vm49, %v27, 0
    %v63 = vsel %vm49, %v28, 0
    %v66 = vsel %vm49, %v29, 0
    %v69 = vsel %vm49, %v30, 0
    %v72 = vsel %vm49, %v31, 0
    %v75 = vsel %vm49, %v32, 0
    %v78 = vsel %vm49, %v33, 0
    %v81 = vsel %vm49, %v34, 0
    %v84 = vsel %vm49, %v35, 0
    %v87 = vsel %vm49, %v36, 0
    %v90 = vsel %vm49, %v37, 0
    %v93 = vsel %vm49, %v38, 0
    %v96 = vsel %vm49, %v39, 0
    %v99 = vsel %vm49, %v40, 0
    %v102 = vsel %vm49, %v41, 0
    %104 = vmatprep.subr.mxu0 0.0
    %105 = vmatpush1.xpose.msra.mxu0 %v102
    %106 = vmatprep.subr.mxu0 0.0
    %107 = vmatpush1.xpose.msra.mxu0 %v99
    %108 = vmatprep.subr.mxu0 0.0
    %109 = vmatpush1.xpose.msra.mxu0 %v96
    %110 = vmatprep.subr.mxu0 0.0
    %111 = vmatpush1.xpose.msra.mxu0 %v93
    %112 = vmatprep.subr.mxu0 0.0
    %113 = vmatpush1.xpose.msra.mxu0 %v90
    %114 = vmatprep.subr.mxu0 0.0
    %115 = vmatpush1.xpose.msra.mxu0 %v87
    %116 = vmatprep.subr.mxu0 0.0
    %117 = vmatpush1.xpose.msra.mxu0 %v84
    %118 = vmatprep.subr.mxu0 0.0
    %119 = vmatpush1.xpose.msra.mxu0 %v81
    %120 = vmatprep.subr.mxu0 0.0
    %121 = vmatpush1.xpose.msra.mxu0 %v78
    %122 = vmatprep.subr.mxu0 0.0
    %123 = vmatpush1.xpose.msra.mxu0 %v75
    %124 = vmatprep.subr.mxu0 0.0
    %125 = vmatpush1.xpose.msra.mxu0 %v72
    %126 = vmatprep.subr.mxu0 0.0
    %127 = vmatpush1.xpose.msra.mxu0 %v69
    %128 = vmatprep.subr.mxu0 0.0
    %129 = vmatpush1.xpose.msra.mxu0 %v66
    %130 = vmatprep.subr.mxu0 0.0
    %131 = vmatpush1.xpose.msra.mxu0 %v63
    %132 = vmatprep.subr.mxu0 0.0
    %133 = vmatpush1.xpose.msra.mxu0 %v60
    %134 = vmatprep.subr.mxu0 0.0
    %135 = vmatpush1.xpose.msra.mxu0 %v57
    %136 = vmatprep.subr.mxu0 0.0
    %137 = vmatpush2.xpose.msra.mxu0 0.0
    %138 = vmatprep.subr.mxu0 0.0
    %139 = vmatpush2.xpose.msra.mxu0 0.0
    %140 = vmatprep.subr.mxu0 0.0
    %141 = vmatpush2.xpose.msra.mxu0 0.0
    %142 = vmatprep.subr.mxu0 0.0
    %143 = vmatpush2.xpose.msra.mxu0 0.0
    %144 = vmatprep.subr.mxu0 0.0
    %145 = vmatpush2.xpose.msra.mxu0 0.0
    %146 = vmatprep.subr.mxu0 0.0
    %147 = vmatpush2.xpose.msra.mxu0 0.0
    %148 = vmatprep.subr.mxu0 0.0
    %149 = vmatpush2.xpose.msra.mxu0 0.0
    %150 = vmatprep.subr.mxu0 0.0
    %151 = vmatpush2.xpose.msra.mxu0 0.0
    %152 = vmatprep.subr.mxu0 0.0
    %153 = vmatpush2.xpose.msra.mxu0 0.0
    %154 = vmatprep.subr.mxu0 0.0
    %155 = vmatpush2.xpose.msra.mxu0 0.0
    %156 = vmatprep.subr.mxu0 0.0
    %157 = vmatpush2.xpose.msra.mxu0 0.0
    %158 = vmatprep.subr.mxu0 0.0
    %159 = vmatpush2.xpose.msra.mxu0 0.0
    %160 = vmatprep.subr.mxu0 0.0
    %161 = vmatpush2.xpose.msra.mxu0 0.0
    %162 = vmatprep.subr.mxu0 0.0
    %163 = vmatpush2.xpose.msra.mxu0 0.0
    %164 = vmatprep.subr.mxu0 0.0
    %165 = vmatpush2.xpose.msra.mxu0 0.0
    %166 = vmatprep.subr.mxu0 0.0
    %167 = vmatpush2.xpose.msra.mxu0 0.0
    %168 = vmatprep.mubr.f32.mxu0 0.0
    %169 = vmatmul.mubr.f32.gmra.mxu0 %v51
    %v170 = vpop.f32.mrf.mxu0
    %v171 = vadd.f32 %v47, %v170
    %v172 = vpop.f32.mrf.mxu0
    %173 = vmatprep.mubr.f32.mxu0 0.0
    %174 = vmatmul.mubr.f32.gmra.mxu0 %v54
    %v175 = vpop.f32.mrf.mxu0
    %v176 = vadd.f32 %v47, %v175
    %v177 = vpop.f32.mrf.mxu0
    %178 = vdwg.mxu0
    %v179 = vld [vmem:[#allocation3] sm:$0xff]
    %v180 = vld [vmem:[#allocation3 + $0x8] sm:$0xff]
    %181 = vmax.xlane.f32.xlu0 %v171
    %v182 = vpop.xlane.xlu0 %181
    %183 = vmax.xlane.f32.xlu0 %v176
    %v184 = vpop.xlane.xlu0 %183
    %v185 = vmax.f32 %v179, %v182
    %v186 = vmax.f32 %v180, %v184
    %v187 = vsub.f32 %v179, %v185
    %v188 = vsub.f32 %v180, %v186
    %v189 = vmul.f32 %v187, 1.442695
    %v190 = vpow.pop %v189
    %v191 = vmul.f32 %v188, 1.442695
    %v192 = vpow.pop %v191
    %v193 = vld [vmem:[#allocation4] sm:$0xff]
    %v194 = vld [vmem:[#allocation4 + $0x8] sm:$0xff]
    %v195 = vmul.f32 %v190, %v193
    %v196 = vmul.f32 %v192, %v194
    %198 = vset.pattern.permute.xlu0 0
    %199 = vperm.xlu0 %198, %v185
    %v200 = vpop.permute.xlu0 %199
    %203 = vset.pattern.permute.xlu0 0
    %204 = vperm.xlu0 %203, %v186
    %v205 = vpop.permute.xlu0 %204
    %v207 = vsub.f32 %v171, %v200
    %v208 = vsub.f32 %v176, %v205
    %v209 = vmul.f32 %v207, 1.442695
    %v210 = vpow.pop %v209
    %v211 = vmul.f32 %v208, 1.442695
    %v212 = vpow.pop %v211
    %213 = vadd.xlane.f32.xlu0 %v210
    %v214 = vpop.xlane.xlu0 %213
    %215 = vadd.xlane.f32.xlu0 %v212
    %v216 = vpop.xlane.xlu0 %215
    %v217 = vadd.f32 %v195, %v214
    %v218 = vadd.f32 %v196, %v216
    %vm219 = vcmask 7168
    %220 = vst.msk [vmem:[#allocation4] sm:$0xff] %vm219, %v217
    %221 = vst.msk [vmem:[#allocation4 + $0x8] sm:$0xff] %vm219, %v218
    %222 = vst.msk [vmem:[#allocation3] sm:$0xff] %vm219, %v185
    %223 = vst.msk [vmem:[#allocation3 + $0x8] sm:$0xff] %vm219, %v186
    %s224 = smul.u32 0, 16
    %s225 = scalar_lea.vmem [#allocation2], %s224
    %226 = vst [vmem:[%s225] sm:$0xff] %v171
    %227 = vst [vmem:[%s225 + $0x8] sm:$0xff] %v176
    // Predicated region
    $region18: #{tpu_custom_call.1} parent=1 // pred_check
      %p228 = pneg %p15
    $region19: #{tpu_custom_call.1} parent=1 // pred_check_branch
      %230 = sbr.rel (%p228) target = $region21
    $region20: #{tpu_custom_call.1} parent=1 // pred_region
      %v231 = vld [vmem:[#allocation4] sm:$0xff]
      %v232 = vld [vmem:[#allocation4 + $0x8] sm:$0xff]
      %v233 = vrcp.pop %v231
      %v234 = vrcp.pop %v232
      %v235 = vmul.f32 %v231, %v233
      %v236 = vmul.f32 %v232, %v234
      %v237 = vsub.f32 2.0, %v235
      %v238 = vsub.f32 2.0, %v236
      %v239 = vmul.f32 %v233, %v237
      %v240 = vmul.f32 %v234, %v238
      %v241 = vld [vmem:[#allocation3] sm:$0xff]
      %v242 = vld [vmem:[#allocation3 + $0x8] sm:$0xff]
      %v243 = vld [vmem:[#allocation2] sm:$0xff]
      %v244 = vld [vmem:[#allocation2 + $0x8] sm:$0xff]
      %246 = vset.pattern.permute.xlu0 0
      %247 = vperm.xlu0 %246, %v241
      %v248 = vpop.permute.xlu0 %247
      %251 = vset.pattern.permute.xlu0 0
      %252 = vperm.xlu0 %251, %v242
      %v253 = vpop.permute.xlu0 %252
      %v255 = vsub.f32 %v243, %v248
      %v256 = vsub.f32 %v244, %v253
      %v257 = vmul.f32 %v255, 1.442695
      %v258 = vpow.pop %v257
      %v259 = vmul.f32 %v256, 1.442695
      %v260 = vpow.pop %v259
      %262 = vset.pattern.permute.xlu0 0
      %263 = vperm.xlu0 %262, %v239
      %v264 = vpop.permute.xlu0 %263
      %267 = vset.pattern.permute.xlu0 0
      %268 = vperm.xlu0 %267, %v240
      %v269 = vpop.permute.xlu0 %268
      %v271 = vmul.f32 %v258, %v264
      %v272 = vmul.f32 %v260, %v269
      %273 = vst [vmem:[#allocation5] sm:$0xff] %v271
      %274 = vst [vmem:[#allocation5 + $0x8] sm:$0xff] %v272
    $region21: #{tpu_custom_call.1} parent=1 // pred_fallthru
      _
    // Predicated region
    $region22: #{tpu_custom_call.1} parent=1 // pred_check
      _
    $region23: #{tpu_custom_call.1} parent=1 // pred_check_branch
      %276 = sbr.rel (0) target = $region25
    $region24: #{tpu_custom_call.1} parent=1 // pred_region
      %s278 = ssub.s32 256, 256
      %279 = vsyncadd [#allocation6], %s278
      %s280 = sshll.u32 [#allocation5], 4
      %s281 = int_to_ptr.vmem [resolvable:$true] %s280
      %286 = dma.vmem_to_hbm [thread:$0]  %s281, 256, %s3, [#allocation6], 128, 128, 8
    $region25: #{tpu_custom_call.1} parent=1 // pred_fallthru
      _
    // Predicated region
    $region26: #{tpu_custom_call.1} parent=1 // pred_check
      _
    $region27: #{tpu_custom_call.1} parent=1 // pred_check_branch
      %288 = sbr.rel (0) target = $region29
    $region28: #{tpu_custom_call.1} parent=1 // pred_region
      %289 = dma.done [#allocation6], 256
    $region29: #{tpu_custom_call.1} parent=1 // pred_fallthru
      _
    %290 = vsyncpa [#allocation6], 1

</llo_original>
